<compile_context>
chip_gen: v5e
topology: v5e:2x2
jax: 0.10.0
libtpu: 0.0.40
codegen_flags: <defaults>
</compile_context>

<pallas_src>
import jax
import jax.numpy as jnp
from jax.experimental import pallas as pl


def _scale_mul_kernel(scale_ref, x_ref, o_ref):
    # scale_ref: (NC, 1)  per-channel scale column
    # x_ref:     (NC, HW) activation
    # o_ref:     (NC, HW) output
    # (NC, 1) broadcasts against (NC, HW) along lanes — cheap VPU broadcast.
    o_ref[...] = x_ref[...] * scale_ref[...]


def channel_scale_mul(x390, x385):
    """Compute x390 * x385 with PyTorch broadcasting semantics.

    x390: (N, C, 1, 1)
    x385: (N, C, H, W)
    returns (N, C, H, W)
    """
    n, c, h, w = x385.shape
    assert x390.shape == (n, c, 1, 1)

    nc = n * c
    hw = h * w

    x2d = x385.reshape(nc, hw)   # contiguous view, no data movement
    s2d = x390.reshape(nc, 1)    # contiguous view, no data movement

    # Single grid-less invocation: full-array blocks (hw equals the full array
    # dim, so the (8,128) block constraint is satisfied even though hw < 128).
    out2d = pl.pallas_call(
        _scale_mul_kernel,
        out_shape=jax.ShapeDtypeStruct((nc, hw), x385.dtype),
        in_specs=[
            pl.BlockSpec((nc, 1), lambda: (0, 0)),    # per-channel scale
            pl.BlockSpec((nc, hw), lambda: (0, 0)),   # activation
        ],
        out_specs=pl.BlockSpec((nc, hw), lambda: (0, 0)),
    )(s2d, x2d)

    return out2d.reshape(n, c, h, w)


if __name__ == "__main__":
    key = jax.random.PRNGKey(0)
    k1, k2 = jax.random.split(key)

    # Shapes from the module's forward (already small: 1x1536x7x7 ~ 300 KB).
    x385 = jax.random.normal(k1, (1, 1536, 7, 7), dtype=jnp.float32)
    x390 = jax.random.normal(k2, (1, 1536, 1, 1), dtype=jnp.float32)

    out = channel_scale_mul(x390, x385)
    out = jax.block_until_ready(out)

    # Correctness check against plain-JAX broadcasting (same as torch mul).
    ref = x390 * x385
    assert out.shape == ref.shape
    assert jnp.allclose(out, ref, atol=1e-6, rtol=1e-6)

    print("KERNEL_OK")
</pallas_src>

<mosaic_0001>
module attributes {stable_mosaic.version = 11 : i64} {
  func.func @_scale_mul_kernel(%arg0: memref<1536x1xf32, #tpu.memory_space<vmem>>, %arg1: memref<1536x49xf32, #tpu.memory_space<vmem>>, %arg2: memref<1536x49xf32, #tpu.memory_space<vmem>>) attributes {dimension_semantics = [], scalar_prefetch = 0 : i64, scratch_operands = 0 : i64, tpu.core_type = #tpu.core_type<tc>} {
    %c0 = arith.constant 0 : index
    %c0_0 = arith.constant 0 : index
    %0 = vector.load %arg1[%c0, %c0_0] : memref<1536x49xf32, #tpu.memory_space<vmem>>, vector<1536x49xf32>
    %c0_1 = arith.constant 0 : index
    %c0_2 = arith.constant 0 : index
    %1 = vector.load %arg0[%c0_1, %c0_2] : memref<1536x1xf32, #tpu.memory_space<vmem>>, vector<1536x1xf32>
    %2 = vector.broadcast %1 : vector<1536x1xf32> to vector<1536x49xf32>
    %3 = arith.mulf %0, %2 : vector<1536x49xf32>
    %c0_3 = arith.constant 0 : index
    %c0_4 = arith.constant 0 : index
    %4 = vector.load %arg2[%c0_3, %c0_4] : memref<1536x49xf32, #tpu.memory_space<vmem>>, vector<1536x49xf32>
    tpu.vector_store %arg2[%c0_3, %c0_4], %3 {strides = array<i32>} : memref<1536x49xf32, #tpu.memory_space<vmem>>, vector<1536x49xf32>,
    return
  }
}

</mosaic_0001>

<llo_original>
// kernel: tpu_custom_call.1
$region0: #{tpu_custom_call.1}
  #allocation0 [shape = 'u32[]', space=smem, size = 0x4, offset = 0x4, fixed_abs, tag = 'smem constant byte address 0x4 - core index']
  #allocation1 [shape = 'u32[72,128]{1,0:T(1,128)}', space=vmem, size = 0x9000, scoped, tag = 'internal scratch']
  %s0 = inlined_call_operand.vmem [shape: f32[1536,1], index: 0, kind: input, shape index: {}]
  %s1 = inlined_call_operand.vmem [shape: f32[1536,49], index: 1, kind: input, shape index: {}]
  %s2 = inlined_call_operand.vmem [shape: f32[1536,49], index: 2, kind: output, shape index: {}]
  %s3 = sld [smem:[#allocation0]]
  $region18: #{tpu_custom_call.1} parent=0
    _
  %s5 = ssub.s32 1, %s3
  %s6 = scalar_select 0, %s5, %s3
  // Predicated region
  $region2: #{tpu_custom_call.1} parent=0 // pred_check
    _
  $region3: #{tpu_custom_call.1} parent=0 // pred_check_branch
    %8 = sbr.rel (0) target = $region5
  $region4: #{tpu_custom_call.1} parent=0 // pred_region
    _
  $region5: #{tpu_custom_call.1} parent=0 // pred_fallthru
    _
  // Predicated region
  $region6: #{tpu_custom_call.1} parent=0 // pred_check
    _
  $region7: #{tpu_custom_call.1} parent=0 // pred_check_branch
    %10 = sbr.rel (0) target = $region9
  $region8: #{tpu_custom_call.1} parent=0 // pred_region
    _
  $region9: #{tpu_custom_call.1} parent=0 // pred_fallthru
    _
  %v11 = vld [vmem:[%s1] sm:$0xff]
  %v12 = vld [vmem:[%s1 + $0x8] sm:$0xff]
  %v13 = vld [vmem:[%s1 + $0x10] sm:$0xff]
  %v14 = vld [vmem:[%s1 + $0x18] sm:$0xff]
  %v15 = vld [vmem:[%s1 + $0x20] sm:$0xff]
  %v16 = vld [vmem:[%s1 + $0x28] sm:$0xff]
  %v17 = vld [vmem:[%s1 + $0x30] sm:$0xff]
  %v18 = vld [vmem:[%s1 + $0x38] sm:$0xff]
  %v19 = vld [vmem:[%s1 + $0x40] sm:$0xff]
  %v20 = vld [vmem:[%s1 + $0x48] sm:$0xff]
  %v21 = vld [vmem:[%s1 + $0x50] sm:$0xff]
  %v22 = vld [vmem:[%s1 + $0x58] sm:$0xff]
  %v23 = vld [vmem:[%s1 + $0x60] sm:$0xff]
  %v24 = vld [vmem:[%s1 + $0x68] sm:$0xff]
  %v25 = vld [vmem:[%s1 + $0x70] sm:$0xff]
  %v26 = vld [vmem:[%s1 + $0x78] sm:$0xff]
  %v27 = vld [vmem:[%s1 + $0x80] sm:$0xff]
  %v28 = vld [vmem:[%s1 + $0x88] sm:$0xff]
  %v29 = vld [vmem:[%s1 + $0x90] sm:$0xff]
  %v30 = vld [vmem:[%s1 + $0x98] sm:$0xff]
  %v31 = vld [vmem:[%s1 + $0xa0] sm:$0xff]
  %v32 = vld [vmem:[%s1 + $0xa8] sm:$0xff]
  %v33 = vld [vmem:[%s1 + $0xb0] sm:$0xff]
  %v34 = vld [vmem:[%s1 + $0xb8] sm:$0xff]
  %v35 = vld [vmem:[%s1 + $0xc0] sm:$0xff]
  %v36 = vld [vmem:[%s1 + $0xc8] sm:$0xff]
  %v37 = vld [vmem:[%s1 + $0xd0] sm:$0xff]
  %v38 = vld [vmem:[%s1 + $0xd8] sm:$0xff]
  %v39 = vld [vmem:[%s1 + $0xe0] sm:$0xff]
  %v40 = vld [vmem:[%s1 + $0xe8] sm:$0xff]
  %v41 = vld [vmem:[%s1 + $0xf0] sm:$0xff]
  %v42 = vld [vmem:[%s1 + $0xf8] sm:$0xff]
  %v43 = vld [vmem:[%s1 + $0x100] sm:$0xff]
  %v44 = vld [vmem:[%s1 + $0x108] sm:$0xff]
  %v45 = vld [vmem:[%s1 + $0x110] sm:$0xff]
  %v46 = vld [vmem:[%s1 + $0x118] sm:$0xff]
  %v47 = vld [vmem:[%s1 + $0x120] sm:$0xff]
  %v48 = vld [vmem:[%s1 + $0x128] sm:$0xff]
  %v49 = vld [vmem:[%s1 + $0x130] sm:$0xff]
  %v50 = vld [vmem:[%s1 + $0x138] sm:$0xff]
  %v51 = vld [vmem:[%s1 + $0x140] sm:$0xff]
  %v52 = vld [vmem:[%s1 + $0x148] sm:$0xff]
  %v53 = vld [vmem:[%s1 + $0x150] sm:$0xff]
  %v54 = vld [vmem:[%s1 + $0x158] sm:$0xff]
  %v55 = vld [vmem:[%s1 + $0x160] sm:$0xff]
  %v56 = vld [vmem:[%s1 + $0x168] sm:$0xff]
  %v57 = vld [vmem:[%s1 + $0x170] sm:$0xff]
  %v58 = vld [vmem:[%s1 + $0x178] sm:$0xff]
  %v59 = vld [vmem:[%s1 + $0x180] sm:$0xff]
  %v60 = vld [vmem:[%s1 + $0x188] sm:$0xff]
  %v61 = vld [vmem:[%s1 + $0x190] sm:$0xff]
  %v62 = vld [vmem:[%s1 + $0x198] sm:$0xff]
  %v63 = vld [vmem:[%s1 + $0x1a0] sm:$0xff]
  %v64 = vld [vmem:[%s1 + $0x1a8] sm:$0xff]
  %v65 = vld [vmem:[%s1 + $0x1b0] sm:$0xff]
  %v66 = vld [vmem:[%s1 + $0x1b8] sm:$0xff]
  %v67 = vld [vmem:[%s1 + $0x1c0] sm:$0xff]
  %v68 = vld [vmem:[%s1 + $0x1c8] sm:$0xff]
  %v69 = vld [vmem:[%s1 + $0x1d0] sm:$0xff]
  %v70 = vld [vmem:[%s1 + $0x1d8] sm:$0xff]
  %v71 = vld [vmem:[%s1 + $0x1e0] sm:$0xff]
  %v72 = vld [vmem:[%s1 + $0x1e8] sm:$0xff]
  %v73 = vld [vmem:[%s1 + $0x1f0] sm:$0xff]
  %v74 = vld [vmem:[%s1 + $0x1f8] sm:$0xff]
  %v75 = vld [vmem:[%s1 + $0x200] sm:$0xff]
  %v76 = vld [vmem:[%s1 + $0x208] sm:$0xff]
  %v77 = vld [vmem:[%s1 + $0x210] sm:$0xff]
  %v78 = vld [vmem:[%s1 + $0x218] sm:$0xff]
  %v79 = vld [vmem:[%s1 + $0x220] sm:$0xff]
  %v80 = vld [vmem:[%s1 + $0x228] sm:$0xff]
  %v81 = vld [vmem:[%s1 + $0x230] sm:$0xff]
  %v82 = vld [vmem:[%s1 + $0x238] sm:$0xff]
  %v83 = vld [vmem:[%s1 + $0x240] sm:$0xff]
  %v84 = vld [vmem:[%s1 + $0x248] sm:$0xff]
  %v85 = vld [vmem:[%s1 + $0x250] sm:$0xff]
  %v86 = vld [vmem:[%s1 + $0x258] sm:$0xff]
  %v87 = vld [vmem:[%s1 + $0x260] sm:$0xff]
  %v88 = vld [vmem:[%s1 + $0x268] sm:$0xff]
  %v89 = vld [vmem:[%s1 + $0x270] sm:$0xff]
  %v90 = vld [vmem:[%s1 + $0x278] sm:$0xff]
  %v91 = vld [vmem:[%s1 + $0x280] sm:$0xff]
  %v92 = vld [vmem:[%s1 + $0x288] sm:$0xff]
  %v93 = vld [vmem:[%s1 + $0x290] sm:$0xff]
  %v94 = vld [vmem:[%s1 + $0x298] sm:$0xff]
  %v95 = vld [vmem:[%s1 + $0x2a0] sm:$0xff]
  %v96 = vld [vmem:[%s1 + $0x2a8] sm:$0xff]
  %v97 = vld [vmem:[%s1 + $0x2b0] sm:$0xff]
  %v98 = vld [vmem:[%s1 + $0x2b8] sm:$0xff]
  %v99 = vld [vmem:[%s1 + $0x2c0] sm:$0xff]
  %v100 = vld [vmem:[%s1 + $0x2c8] sm:$0xff]
  %v101 = vld [vmem:[%s1 + $0x2d0] sm:$0xff]
  %v102 = vld [vmem:[%s1 + $0x2d8] sm:$0xff]
  %v103 = vld [vmem:[%s1 + $0x2e0] sm:$0xff]
  %v104 = vld [vmem:[%s1 + $0x2e8] sm:$0xff]
  %v105 = vld [vmem:[%s1 + $0x2f0] sm:$0xff]
  %v106 = vld [vmem:[%s1 + $0x2f8] sm:$0xff]
  %v107 = vld [vmem:[%s1 + $0x300] sm:$0xff]
  %v108 = vld [vmem:[%s1 + $0x308] sm:$0xff]
  %v109 = vld [vmem:[%s1 + $0x310] sm:$0xff]
  %v110 = vld [vmem:[%s1 + $0x318] sm:$0xff]
  %v111 = vld [vmem:[%s1 + $0x320] sm:$0xff]
  %v112 = vld [vmem:[%s1 + $0x328] sm:$0xff]
  %v113 = vld [vmem:[%s1 + $0x330] sm:$0xff]
  %v114 = vld [vmem:[%s1 + $0x338] sm:$0xff]
  %v115 = vld [vmem:[%s1 + $0x340] sm:$0xff]
  %v116 = vld [vmem:[%s1 + $0x348] sm:$0xff]
  %v117 = vld [vmem:[%s1 + $0x350] sm:$0xff]
  %v118 = vld [vmem:[%s1 + $0x358] sm:$0xff]
  %v119 = vld [vmem:[%s1 + $0x360] sm:$0xff]
  %v120 = vld [vmem:[%s1 + $0x368] sm:$0xff]
  %v121 = vld [vmem:[%s1 + $0x370] sm:$0xff]
  %v122 = vld [vmem:[%s1 + $0x378] sm:$0xff]
  %v123 = vld [vmem:[%s1 + $0x380] sm:$0xff]
  %v124 = vld [vmem:[%s1 + $0x388] sm:$0xff]
  %v125 = vld [vmem:[%s1 + $0x390] sm:$0xff]
  %v126 = vld [vmem:[%s1 + $0x398] sm:$0xff]
  %v127 = vld [vmem:[%s1 + $0x3a0] sm:$0xff]
  %v128 = vld [vmem:[%s1 + $0x3a8] sm:$0xff]
  %v129 = vld [vmem:[%s1 + $0x3b0] sm:$0xff]
  %v130 = vld [vmem:[%s1 + $0x3b8] sm:$0xff]
  %v131 = vld [vmem:[%s1 + $0x3c0] sm:$0xff]
  %v132 = vld [vmem:[%s1 + $0x3c8] sm:$0xff]
  %v133 = vld [vmem:[%s1 + $0x3d0] sm:$0xff]
  %v134 = vld [vmem:[%s1 + $0x3d8] sm:$0xff]
  %v135 = vld [vmem:[%s1 + $0x3e0] sm:$0xff]
  %v136 = vld [vmem:[%s1 + $0x3e8] sm:$0xff]
  %v137 = vld [vmem:[%s1 + $0x3f0] sm:$0xff]
  %v138 = vld [vmem:[%s1 + $0x3f8] sm:$0xff]
  %v139 = vld [vmem:[%s1 + $0x400] sm:$0xff]
  %v140 = vld [vmem:[%s1 + $0x408] sm:$0xff]
  %v141 = vld [vmem:[%s1 + $0x410] sm:$0xff]
  %v142 = vld [vmem:[%s1 + $0x418] sm:$0xff]
  %v143 = vld [vmem:[%s1 + $0x420] sm:$0xff]
  %v144 = vld [vmem:[%s1 + $0x428] sm:$0xff]
  %v145 = vld [vmem:[%s1 + $0x430] sm:$0xff]
  %v146 = vld [vmem:[%s1 + $0x438] sm:$0xff]
  %v147 = vld [vmem:[%s1 + $0x440] sm:$0xff]
  %v148 = vld [vmem:[%s1 + $0x448] sm:$0xff]
  %v149 = vld [vmem:[%s1 + $0x450] sm:$0xff]
  %v150 = vld [vmem:[%s1 + $0x458] sm:$0xff]
  %v151 = vld [vmem:[%s1 + $0x460] sm:$0xff]
  %v152 = vld [vmem:[%s1 + $0x468] sm:$0xff]
  %v153 = vld [vmem:[%s1 + $0x470] sm:$0xff]
  %v154 = vld [vmem:[%s1 + $0x478] sm:$0xff]
  %v155 = vld [vmem:[%s1 + $0x480] sm:$0xff]
  %v156 = vld [vmem:[%s1 + $0x488] sm:$0xff]
  %v157 = vld [vmem:[%s1 + $0x490] sm:$0xff]
  %v158 = vld [vmem:[%s1 + $0x498] sm:$0xff]
  %v159 = vld [vmem:[%s1 + $0x4a0] sm:$0xff]
  %v160 = vld [vmem:[%s1 + $0x4a8] sm:$0xff]
  %v161 = vld [vmem:[%s1 + $0x4b0] sm:$0xff]
  %v162 = vld [vmem:[%s1 + $0x4b8] sm:$0xff]
  %v163 = vld [vmem:[%s1 + $0x4c0] sm:$0xff]
  %v164 = vld [vmem:[%s1 + $0x4c8] sm:$0xff]
  %v165 = vld [vmem:[%s1 + $0x4d0] sm:$0xff]
  %v166 = vld [vmem:[%s1 + $0x4d8] sm:$0xff]
  %v167 = vld [vmem:[%s1 + $0x4e0] sm:$0xff]
  %v168 = vld [vmem:[%s1 + $0x4e8] sm:$0xff]
  %v169 = vld [vmem:[%s1 + $0x4f0] sm:$0xff]
  %v170 = vld [vmem:[%s1 + $0x4f8] sm:$0xff]
  %v171 = vld [vmem:[%s1 + $0x500] sm:$0xff]
  %v172 = vld [vmem:[%s1 + $0x508] sm:$0xff]
  %v173 = vld [vmem:[%s1 + $0x510] sm:$0xff]
  %v174 = vld [vmem:[%s1 + $0x518] sm:$0xff]
  %v175 = vld [vmem:[%s1 + $0x520] sm:$0xff]
  %v176 = vld [vmem:[%s1 + $0x528] sm:$0xff]
  %v177 = vld [vmem:[%s1 + $0x530] sm:$0xff]
  %v178 = vld [vmem:[%s1 + $0x538] sm:$0xff]
  %v179 = vld [vmem:[%s1 + $0x540] sm:$0xff]
  %v180 = vld [vmem:[%s1 + $0x548] sm:$0xff]
  %v181 = vld [vmem:[%s1 + $0x550] sm:$0xff]
  %v182 = vld [vmem:[%s1 + $0x558] sm:$0xff]
  %v183 = vld [vmem:[%s1 + $0x560] sm:$0xff]
  %v184 = vld [vmem:[%s1 + $0x568] sm:$0xff]
  %v185 = vld [vmem:[%s1 + $0x570] sm:$0xff]
  %v186 = vld [vmem:[%s1 + $0x578] sm:$0xff]
  %v187 = vld [vmem:[%s1 + $0x580] sm:$0xff]
  %v188 = vld [vmem:[%s1 + $0x588] sm:$0xff]
  %v189 = vld [vmem:[%s1 + $0x590] sm:$0xff]
  %v190 = vld [vmem:[%s1 + $0x598] sm:$0xff]
  %v191 = vld [vmem:[%s1 + $0x5a0] sm:$0xff]
  %v192 = vld [vmem:[%s1 + $0x5a8] sm:$0xff]
  %v193 = vld [vmem:[%s1 + $0x5b0] sm:$0xff]
  %v194 = vld [vmem:[%s1 + $0x5b8] sm:$0xff]
  %v195 = vld [vmem:[%s1 + $0x5c0] sm:$0xff]
  %v196 = vld [vmem:[%s1 + $0x5c8] sm:$0xff]
  %v197 = vld [vmem:[%s1 + $0x5d0] sm:$0xff]
  %v198 = vld [vmem:[%s1 + $0x5d8] sm:$0xff]
  %v199 = vld [vmem:[%s1 + $0x5e0] sm:$0xff]
  %v200 = vld [vmem:[%s1 + $0x5e8] sm:$0xff]
  %v201 = vld [vmem:[%s1 + $0x5f0] sm:$0xff]
  %v202 = vld [vmem:[%s1 + $0x5f8] sm:$0xff]
  %v203 = vld [vmem:[%s0] sm:$0xff]
  %v204 = vld [vmem:[%s0 + $0x8] sm:$0xff]
  %v205 = vld [vmem:[%s0 + $0x10] sm:$0xff]
  %v206 = vld [vmem:[%s0 + $0x18] sm:$0xff]
  %v207 = vld [vmem:[%s0 + $0x20] sm:$0xff]
  %v208 = vld [vmem:[%s0 + $0x28] sm:$0xff]
  %v209 = vld [vmem:[%s0 + $0x30] sm:$0xff]
  %v210 = vld [vmem:[%s0 + $0x38] sm:$0xff]
  %v211 = vld [vmem:[%s0 + $0x40] sm:$0xff]
  %v212 = vld [vmem:[%s0 + $0x48] sm:$0xff]
  %v213 = vld [vmem:[%s0 + $0x50] sm:$0xff]
  %v214 = vld [vmem:[%s0 + $0x58] sm:$0xff]
  %v215 = vld [vmem:[%s0 + $0x60] sm:$0xff]
  %v216 = vld [vmem:[%s0 + $0x68] sm:$0xff]
  %v217 = vld [vmem:[%s0 + $0x70] sm:$0xff]
  %v218 = vld [vmem:[%s0 + $0x78] sm:$0xff]
  %v219 = vld [vmem:[%s0 + $0x80] sm:$0xff]
  %v220 = vld [vmem:[%s0 + $0x88] sm:$0xff]
  %v221 = vld [vmem:[%s0 + $0x90] sm:$0xff]
  %v222 = vld [vmem:[%s0 + $0x98] sm:$0xff]
  %v223 = vld [vmem:[%s0 + $0xa0] sm:$0xff]
  %v224 = vld [vmem:[%s0 + $0xa8] sm:$0xff]
  %v225 = vld [vmem:[%s0 + $0xb0] sm:$0xff]
  %v226 = vld [vmem:[%s0 + $0xb8] sm:$0xff]
  %v227 = vld [vmem:[%s0 + $0xc0] sm:$0xff]
  %v228 = vld [vmem:[%s0 + $0xc8] sm:$0xff]
  %v229 = vld [vmem:[%s0 + $0xd0] sm:$0xff]
  %v230 = vld [vmem:[%s0 + $0xd8] sm:$0xff]
  %v231 = vld [vmem:[%s0 + $0xe0] sm:$0xff]
  %v232 = vld [vmem:[%s0 + $0xe8] sm:$0xff]
  %v233 = vld [vmem:[%s0 + $0xf0] sm:$0xff]
  %v234 = vld [vmem:[%s0 + $0xf8] sm:$0xff]
  %v235 = vld [vmem:[%s0 + $0x100] sm:$0xff]
  %v236 = vld [vmem:[%s0 + $0x108] sm:$0xff]
  %v237 = vld [vmem:[%s0 + $0x110] sm:$0xff]
  %v238 = vld [vmem:[%s0 + $0x118] sm:$0xff]
  %v239 = vld [vmem:[%s0 + $0x120] sm:$0xff]
  %v240 = vld [vmem:[%s0 + $0x128] sm:$0xff]
  %v241 = vld [vmem:[%s0 + $0x130] sm:$0xff]
  %v242 = vld [vmem:[%s0 + $0x138] sm:$0xff]
  %v243 = vld [vmem:[%s0 + $0x140] sm:$0xff]
  %v244 = vld [vmem:[%s0 + $0x148] sm:$0xff]
  %v245 = vld [vmem:[%s0 + $0x150] sm:$0xff]
  %v246 = vld [vmem:[%s0 + $0x158] sm:$0xff]
  %v247 = vld [vmem:[%s0 + $0x160] sm:$0xff]
  %v248 = vld [vmem:[%s0 + $0x168] sm:$0xff]
  %v249 = vld [vmem:[%s0 + $0x170] sm:$0xff]
  %v250 = vld [vmem:[%s0 + $0x178] sm:$0xff]
  %v251 = vld [vmem:[%s0 + $0x180] sm:$0xff]
  %v252 = vld [vmem:[%s0 + $0x188] sm:$0xff]
  %v253 = vld [vmem:[%s0 + $0x190] sm:$0xff]
  %v254 = vld [vmem:[%s0 + $0x198] sm:$0xff]
  %v255 = vld [vmem:[%s0 + $0x1a0] sm:$0xff]
  %v256 = vld [vmem:[%s0 + $0x1a8] sm:$0xff]
  %v257 = vld [vmem:[%s0 + $0x1b0] sm:$0xff]
  %v258 = vld [vmem:[%s0 + $0x1b8] sm:$0xff]
  %v259 = vld [vmem:[%s0 + $0x1c0] sm:$0xff]
  %v260 = vld [vmem:[%s0 + $0x1c8] sm:$0xff]
  %v261 = vld [vmem:[%s0 + $0x1d0] sm:$0xff]
  %v262 = vld [vmem:[%s0 + $0x1d8] sm:$0xff]
  %v263 = vld [vmem:[%s0 + $0x1e0] sm:$0xff]
  %v264 = vld [vmem:[%s0 + $0x1e8] sm:$0xff]
  %v265 = vld [vmem:[%s0 + $0x1f0] sm:$0xff]
  %v266 = vld [vmem:[%s0 + $0x1f8] sm:$0xff]
  %v267 = vld [vmem:[%s0 + $0x200] sm:$0xff]
  %v268 = vld [vmem:[%s0 + $0x208] sm:$0xff]
  %v269 = vld [vmem:[%s0 + $0x210] sm:$0xff]
  %v270 = vld [vmem:[%s0 + $0x218] sm:$0xff]
  %v271 = vld [vmem:[%s0 + $0x220] sm:$0xff]
  %v272 = vld [vmem:[%s0 + $0x228] sm:$0xff]
  %v273 = vld [vmem:[%s0 + $0x230] sm:$0xff]
  %v274 = vld [vmem:[%s0 + $0x238] sm:$0xff]
  %v275 = vld [vmem:[%s0 + $0x240] sm:$0xff]
  %v276 = vld [vmem:[%s0 + $0x248] sm:$0xff]
  %v277 = vld [vmem:[%s0 + $0x250] sm:$0xff]
  %v278 = vld [vmem:[%s0 + $0x258] sm:$0xff]
  %v279 = vld [vmem:[%s0 + $0x260] sm:$0xff]
  %v280 = vld [vmem:[%s0 + $0x268] sm:$0xff]
  %v281 = vld [vmem:[%s0 + $0x270] sm:$0xff]
  %v282 = vld [vmem:[%s0 + $0x278] sm:$0xff]
  %v283 = vld [vmem:[%s0 + $0x280] sm:$0xff]
  %v284 = vld [vmem:[%s0 + $0x288] sm:$0xff]
  %v285 = vld [vmem:[%s0 + $0x290] sm:$0xff]
  %v286 = vld [vmem:[%s0 + $0x298] sm:$0xff]
  %v287 = vld [vmem:[%s0 + $0x2a0] sm:$0xff]
  %v288 = vld [vmem:[%s0 + $0x2a8] sm:$0xff]
  %v289 = vld [vmem:[%s0 + $0x2b0] sm:$0xff]
  %v290 = vld [vmem:[%s0 + $0x2b8] sm:$0xff]
  %v291 = vld [vmem:[%s0 + $0x2c0] sm:$0xff]
  %v292 = vld [vmem:[%s0 + $0x2c8] sm:$0xff]
  %v293 = vld [vmem:[%s0 + $0x2d0] sm:$0xff]
  %v294 = vld [vmem:[%s0 + $0x2d8] sm:$0xff]
  %v295 = vld [vmem:[%s0 + $0x2e0] sm:$0xff]
  %v296 = vld [vmem:[%s0 + $0x2e8] sm:$0xff]
  %v297 = vld [vmem:[%s0 + $0x2f0] sm:$0xff]
  %v298 = vld [vmem:[%s0 + $0x2f8] sm:$0xff]
  %v299 = vld [vmem:[%s0 + $0x300] sm:$0xff]
  %v300 = vld [vmem:[%s0 + $0x308] sm:$0xff]
  %v301 = vld [vmem:[%s0 + $0x310] sm:$0xff]
  %v302 = vld [vmem:[%s0 + $0x318] sm:$0xff]
  %v303 = vld [vmem:[%s0 + $0x320] sm:$0xff]
  %v304 = vld [vmem:[%s0 + $0x328] sm:$0xff]
  %v305 = vld [vmem:[%s0 + $0x330] sm:$0xff]
  %v306 = vld [vmem:[%s0 + $0x338] sm:$0xff]
  %v307 = vld [vmem:[%s0 + $0x340] sm:$0xff]
  %v308 = vld [vmem:[%s0 + $0x348] sm:$0xff]
  %v309 = vld [vmem:[%s0 + $0x350] sm:$0xff]
  %v310 = vld [vmem:[%s0 + $0x358] sm:$0xff]
  %v311 = vld [vmem:[%s0 + $0x360] sm:$0xff]
  %v312 = vld [vmem:[%s0 + $0x368] sm:$0xff]
  %v313 = vld [vmem:[%s0 + $0x370] sm:$0xff]
  %v314 = vld [vmem:[%s0 + $0x378] sm:$0xff]
  %v315 = vld [vmem:[%s0 + $0x380] sm:$0xff]
  %v316 = vld [vmem:[%s0 + $0x388] sm:$0xff]
  %v317 = vld [vmem:[%s0 + $0x390] sm:$0xff]
  %v318 = vld [vmem:[%s0 + $0x398] sm:$0xff]
  %v319 = vld [vmem:[%s0 + $0x3a0] sm:$0xff]
  %v320 = vld [vmem:[%s0 + $0x3a8] sm:$0xff]
  %v321 = vld [vmem:[%s0 + $0x3b0] sm:$0xff]
  %v322 = vld [vmem:[%s0 + $0x3b8] sm:$0xff]
  %v323 = vld [vmem:[%s0 + $0x3c0] sm:$0xff]
  %v324 = vld [vmem:[%s0 + $0x3c8] sm:$0xff]
  %v325 = vld [vmem:[%s0 + $0x3d0] sm:$0xff]
  %v326 = vld [vmem:[%s0 + $0x3d8] sm:$0xff]
  %v327 = vld [vmem:[%s0 + $0x3e0] sm:$0xff]
  %v328 = vld [vmem:[%s0 + $0x3e8] sm:$0xff]
  %v329 = vld [vmem:[%s0 + $0x3f0] sm:$0xff]
  %v330 = vld [vmem:[%s0 + $0x3f8] sm:$0xff]
  %v331 = vld [vmem:[%s0 + $0x400] sm:$0xff]
  %v332 = vld [vmem:[%s0 + $0x408] sm:$0xff]
  %v333 = vld [vmem:[%s0 + $0x410] sm:$0xff]
  %v334 = vld [vmem:[%s0 + $0x418] sm:$0xff]
  %v335 = vld [vmem:[%s0 + $0x420] sm:$0xff]
  %v336 = vld [vmem:[%s0 + $0x428] sm:$0xff]
  %v337 = vld [vmem:[%s0 + $0x430] sm:$0xff]
  %v338 = vld [vmem:[%s0 + $0x438] sm:$0xff]
  %v339 = vld [vmem:[%s0 + $0x440] sm:$0xff]
  %v340 = vld [vmem:[%s0 + $0x448] sm:$0xff]
  %v341 = vld [vmem:[%s0 + $0x450] sm:$0xff]
  %v342 = vld [vmem:[%s0 + $0x458] sm:$0xff]
  %v343 = vld [vmem:[%s0 + $0x460] sm:$0xff]
  %v344 = vld [vmem:[%s0 + $0x468] sm:$0xff]
  %v345 = vld [vmem:[%s0 + $0x470] sm:$0xff]
  %v346 = vld [vmem:[%s0 + $0x478] sm:$0xff]
  %v347 = vld [vmem:[%s0 + $0x480] sm:$0xff]
  %v348 = vld [vmem:[%s0 + $0x488] sm:$0xff]
  %v349 = vld [vmem:[%s0 + $0x490] sm:$0xff]
  %v350 = vld [vmem:[%s0 + $0x498] sm:$0xff]
  %v351 = vld [vmem:[%s0 + $0x4a0] sm:$0xff]
  %v352 = vld [vmem:[%s0 + $0x4a8] sm:$0xff]
  %v353 = vld [vmem:[%s0 + $0x4b0] sm:$0xff]
  %v354 = vld [vmem:[%s0 + $0x4b8] sm:$0xff]
  %v355 = vld [vmem:[%s0 + $0x4c0] sm:$0xff]
  %v356 = vld [vmem:[%s0 + $0x4c8] sm:$0xff]
  %v357 = vld [vmem:[%s0 + $0x4d0] sm:$0xff]
  %v358 = vld [vmem:[%s0 + $0x4d8] sm:$0xff]
  %v359 = vld [vmem:[%s0 + $0x4e0] sm:$0xff]
  %v360 = vld [vmem:[%s0 + $0x4e8] sm:$0xff]
  %v361 = vld [vmem:[%s0 + $0x4f0] sm:$0xff]
  %v362 = vld [vmem:[%s0 + $0x4f8] sm:$0xff]
  %v363 = vld [vmem:[%s0 + $0x500] sm:$0xff]
  %v364 = vld [vmem:[%s0 + $0x508] sm:$0xff]
  %v365 = vld [vmem:[%s0 + $0x510] sm:$0xff]
  %v366 = vld [vmem:[%s0 + $0x518] sm:$0xff]
  %v367 = vld [vmem:[%s0 + $0x520] sm:$0xff]
  %v368 = vld [vmem:[%s0 + $0x528] sm:$0xff]
  %v369 = vld [vmem:[%s0 + $0x530] sm:$0xff]
  %v370 = vld [vmem:[%s0 + $0x538] sm:$0xff]
  %v371 = vld [vmem:[%s0 + $0x540] sm:$0xff]
  %v372 = vld [vmem:[%s0 + $0x548] sm:$0xff]
  %v373 = vld [vmem:[%s0 + $0x550] sm:$0xff]
  %v374 = vld [vmem:[%s0 + $0x558] sm:$0xff]
  %v375 = vld [vmem:[%s0 + $0x560] sm:$0xff]
  %v376 = vld [vmem:[%s0 + $0x568] sm:$0xff]
  %v377 = vld [vmem:[%s0 + $0x570] sm:$0xff]
  %v378 = vld [vmem:[%s0 + $0x578] sm:$0xff]
  %v379 = vld [vmem:[%s0 + $0x580] sm:$0xff]
  %v380 = vld [vmem:[%s0 + $0x588] sm:$0xff]
  %v381 = vld [vmem:[%s0 + $0x590] sm:$0xff]
  %v382 = vld [vmem:[%s0 + $0x598] sm:$0xff]
  %v383 = vld [vmem:[%s0 + $0x5a0] sm:$0xff]
  %v384 = vld [vmem:[%s0 + $0x5a8] sm:$0xff]
  %v385 = vld [vmem:[%s0 + $0x5b0] sm:$0xff]
  %v386 = vld [vmem:[%s0 + $0x5b8] sm:$0xff]
  %v387 = vld [vmem:[%s0 + $0x5c0] sm:$0xff]
  %v388 = vld [vmem:[%s0 + $0x5c8] sm:$0xff]
  %v389 = vld [vmem:[%s0 + $0x5d0] sm:$0xff]
  %v390 = vld [vmem:[%s0 + $0x5d8] sm:$0xff]
  %v391 = vld [vmem:[%s0 + $0x5e0] sm:$0xff]
  %v392 = vld [vmem:[%s0 + $0x5e8] sm:$0xff]
  %v393 = vld [vmem:[%s0 + $0x5f0] sm:$0xff]
  %v394 = vld [vmem:[%s0 + $0x5f8] sm:$0xff]
  %396 = vset.pattern.permute.xlu0 0
  %397 = vperm.xlu0 %396, %v203
  %v398 = vpop.permute.xlu0 %397
  %401 = vset.pattern.permute.xlu0 0
  %402 = vperm.xlu0 %401, %v204
  %v403 = vpop.permute.xlu0 %402
  %406 = vset.pattern.permute.xlu0 0
  %407 = vperm.xlu0 %406, %v205
  %v408 = vpop.permute.xlu0 %407
  %411 = vset.pattern.permute.xlu0 0
  %412 = vperm.xlu0 %411, %v206
  %v413 = vpop.permute.xlu0 %412
  %416 = vset.pattern.permute.xlu0 0
  %417 = vperm.xlu0 %416, %v207
  %v418 = vpop.permute.xlu0 %417
  %421 = vset.pattern.permute.xlu0 0
  %422 = vperm.xlu0 %421, %v208
  %v423 = vpop.permute.xlu0 %422
  %426 = vset.pattern.permute.xlu0 0
  %427 = vperm.xlu0 %426, %v209
  %v428 = vpop.permute.xlu0 %427
  %431 = vset.pattern.permute.xlu0 0
  %432 = vperm.xlu0 %431, %v210
  %v433 = vpop.permute.xlu0 %432
  %436 = vset.pattern.permute.xlu0 0
  %437 = vperm.xlu0 %436, %v211
  %v438 = vpop.permute.xlu0 %437
  %441 = vset.pattern.permute.xlu0 0
  %442 = vperm.xlu0 %441, %v212
  %v443 = vpop.permute.xlu0 %442
  %446 = vset.pattern.permute.xlu0 0
  %447 = vperm.xlu0 %446, %v213
  %v448 = vpop.permute.xlu0 %447
  %451 = vset.pattern.permute.xlu0 0
  %452 = vperm.xlu0 %451, %v214
  %v453 = vpop.permute.xlu0 %452
  %456 = vset.pattern.permute.xlu0 0
  %457 = vperm.xlu0 %456, %v215
  %v458 = vpop.permute.xlu0 %457
  %461 = vset.pattern.permute.xlu0 0
  %462 = vperm.xlu0 %461, %v216
  %v463 = vpop.permute.xlu0 %462
  %466 = vset.pattern.permute.xlu0 0
  %467 = vperm.xlu0 %466, %v217
  %v468 = vpop.permute.xlu0 %467
  %471 = vset.pattern.permute.xlu0 0
  %472 = vperm.xlu0 %471, %v218
  %v473 = vpop.permute.xlu0 %472
  %476 = vset.pattern.permute.xlu0 0
  %477 = vperm.xlu0 %476, %v219
  %v478 = vpop.permute.xlu0 %477
  %481 = vset.pattern.permute.xlu0 0
  %482 = vperm.xlu0 %481, %v220
  %v483 = vpop.permute.xlu0 %482
  %486 = vset.pattern.permute.xlu0 0
  %487 = vperm.xlu0 %486, %v221
  %v488 = vpop.permute.xlu0 %487
  %491 = vset.pattern.permute.xlu0 0
  %492 = vperm.xlu0 %491, %v222
  %v493 = vpop.permute.xlu0 %492
  %496 = vset.pattern.permute.xlu0 0
  %497 = vperm.xlu0 %496, %v223
  %v498 = vpop.permute.xlu0 %497
  %501 = vset.pattern.permute.xlu0 0
  %502 = vperm.xlu0 %501, %v224
  %v503 = vpop.permute.xlu0 %502
  %506 = vset.pattern.permute.xlu0 0
  %507 = vperm.xlu0 %506, %v225
  %v508 = vpop.permute.xlu0 %507
  %511 = vset.pattern.permute.xlu0 0
  %512 = vperm.xlu0 %511, %v226
  %v513 = vpop.permute.xlu0 %512
  %516 = vset.pattern.permute.xlu0 0
  %517 = vperm.xlu0 %516, %v227
  %v518 = vpop.permute.xlu0 %517
  %521 = vset.pattern.permute.xlu0 0
  %522 = vperm.xlu0 %521, %v228
  %v523 = vpop.permute.xlu0 %522
  %526 = vset.pattern.permute.xlu0 0
  %527 = vperm.xlu0 %526, %v229
  %v528 = vpop.permute.xlu0 %527
  %531 = vset.pattern.permute.xlu0 0
  %532 = vperm.xlu0 %531, %v230
  %v533 = vpop.permute.xlu0 %532
  %536 = vset.pattern.permute.xlu0 0
  %537 = vperm.xlu0 %536, %v231
  %v538 = vpop.permute.xlu0 %537
  %541 = vset.pattern.permute.xlu0 0
  %542 = vperm.xlu0 %541, %v232
  %v543 = vpop.permute.xlu0 %542
  %546 = vset.pattern.permute.xlu0 0
  %547 = vperm.xlu0 %546, %v233
  %v548 = vpop.permute.xlu0 %547
  %551 = vset.pattern.permute.xlu0 0
  %552 = vperm.xlu0 %551, %v234
  %v553 = vpop.permute.xlu0 %552
  %556 = vset.pattern.permute.xlu0 0
  %557 = vperm.xlu0 %556, %v235
  %v558 = vpop.permute.xlu0 %557
  %561 = vset.pattern.permute.xlu0 0
  %562 = vperm.xlu0 %561, %v236
  %v563 = vpop.permute.xlu0 %562
  %566 = vset.pattern.permute.xlu0 0
  %567 = vperm.xlu0 %566, %v237
  %v568 = vpop.permute.xlu0 %567
  %571 = vset.pattern.permute.xlu0 0
  %572 = vperm.xlu0 %571, %v238
  %v573 = vpop.permute.xlu0 %572
  %576 = vset.pattern.permute.xlu0 0
  %577 = vperm.xlu0 %576, %v239
  %v578 = vpop.permute.xlu0 %577
  %581 = vset.pattern.permute.xlu0 0
  %582 = vperm.xlu0 %581, %v240
  %v583 = vpop.permute.xlu0 %582
  %586 = vset.pattern.permute.xlu0 0
  %587 = vperm.xlu0 %586, %v241
  %v588 = vpop.permute.xlu0 %587
  %591 = vset.pattern.permute.xlu0 0
  %592 = vperm.xlu0 %591, %v242
  %v593 = vpop.permute.xlu0 %592
  %596 = vset.pattern.permute.xlu0 0
  %597 = vperm.xlu0 %596, %v243
  %v598 = vpop.permute.xlu0 %597
  %601 = vset.pattern.permute.xlu0 0
  %602 = vperm.xlu0 %601, %v244
  %v603 = vpop.permute.xlu0 %602
  %606 = vset.pattern.permute.xlu0 0
  %607 = vperm.xlu0 %606, %v245
  %v608 = vpop.permute.xlu0 %607
  %611 = vset.pattern.permute.xlu0 0
  %612 = vperm.xlu0 %611, %v246
  %v613 = vpop.permute.xlu0 %612
  %616 = vset.pattern.permute.xlu0 0
  %617 = vperm.xlu0 %616, %v247
  %v618 = vpop.permute.xlu0 %617
  %621 = vset.pattern.permute.xlu0 0
  %622 = vperm.xlu0 %621, %v248
  %v623 = vpop.permute.xlu0 %622
  %626 = vset.pattern.permute.xlu0 0
  %627 = vperm.xlu0 %626, %v249
  %v628 = vpop.permute.xlu0 %627
  %631 = vset.pattern.permute.xlu0 0
  %632 = vperm.xlu0 %631, %v250
  %v633 = vpop.permute.xlu0 %632
  %636 = vset.pattern.permute.xlu0 0
  %637 = vperm.xlu0 %636, %v251
  %v638 = vpop.permute.xlu0 %637
  %641 = vset.pattern.permute.xlu0 0
  %642 = vperm.xlu0 %641, %v252
  %v643 = vpop.permute.xlu0 %642
  %646 = vset.pattern.permute.xlu0 0
  %647 = vperm.xlu0 %646, %v253
  %v648 = vpop.permute.xlu0 %647
  %651 = vset.pattern.permute.xlu0 0
  %652 = vperm.xlu0 %651, %v254
  %v653 = vpop.permute.xlu0 %652
  %656 = vset.pattern.permute.xlu0 0
  %657 = vperm.xlu0 %656, %v255
  %v658 = vpop.permute.xlu0 %657
  %661 = vset.pattern.permute.xlu0 0
  %662 = vperm.xlu0 %661, %v256
  %v663 = vpop.permute.xlu0 %662
  %666 = vset.pattern.permute.xlu0 0
  %667 = vperm.xlu0 %666, %v257
  %v668 = vpop.permute.xlu0 %667
  %671 = vset.pattern.permute.xlu0 0
  %672 = vperm.xlu0 %671, %v258
  %v673 = vpop.permute.xlu0 %672
  %676 = vset.pattern.permute.xlu0 0
  %677 = vperm.xlu0 %676, %v259
  %v678 = vpop.permute.xlu0 %677
  %681 = vset.pattern.permute.xlu0 0
  %682 = vperm.xlu0 %681, %v260
  %v683 = vpop.permute.xlu0 %682
  %686 = vset.pattern.permute.xlu0 0
  %687 = vperm.xlu0 %686, %v261
  %v688 = vpop.permute.xlu0 %687
  %691 = vset.pattern.permute.xlu0 0
  %692 = vperm.xlu0 %691, %v262
  %v693 = vpop.permute.xlu0 %692
  %696 = vset.pattern.permute.xlu0 0
  %697 = vperm.xlu0 %696, %v263
  %v698 = vpop.permute.xlu0 %697
  %701 = vset.pattern.permute.xlu0 0
  %702 = vperm.xlu0 %701, %v264
  %v703 = vpop.permute.xlu0 %702
  %706 = vset.pattern.permute.xlu0 0
  %707 = vperm.xlu0 %706, %v265
  %v708 = vpop.permute.xlu0 %707
  %711 = vset.pattern.permute.xlu0 0
  %712 = vperm.xlu0 %711, %v266
  %v713 = vpop.permute.xlu0 %712
  %716 = vset.pattern.permute.xlu0 0
  %717 = vperm.xlu0 %716, %v267
  %v718 = vpop.permute.xlu0 %717
  %721 = vset.pattern.permute.xlu0 0
  %722 = vperm.xlu0 %721, %v268
  %v723 = vpop.permute.xlu0 %722
  %726 = vset.pattern.permute.xlu0 0
  %727 = vperm.xlu0 %726, %v269
  %v728 = vpop.permute.xlu0 %727
  %731 = vset.pattern.permute.xlu0 0
  %732 = vperm.xlu0 %731, %v270
  %v733 = vpop.permute.xlu0 %732
  %736 = vset.pattern.permute.xlu0 0
  %737 = vperm.xlu0 %736, %v271
  %v738 = vpop.permute.xlu0 %737
  %741 = vset.pattern.permute.xlu0 0
  %742 = vperm.xlu0 %741, %v272
  %v743 = vpop.permute.xlu0 %742
  %746 = vset.pattern.permute.xlu0 0
  %747 = vperm.xlu0 %746, %v273
  %v748 = vpop.permute.xlu0 %747
  %751 = vset.pattern.permute.xlu0 0
  %752 = vperm.xlu0 %751, %v274
  %v753 = vpop.permute.xlu0 %752
  %756 = vset.pattern.permute.xlu0 0
  %757 = vperm.xlu0 %756, %v275
  %v758 = vpop.permute.xlu0 %757
  %761 = vset.pattern.permute.xlu0 0
  %762 = vperm.xlu0 %761, %v276
  %v763 = vpop.permute.xlu0 %762
  %766 = vset.pattern.permute.xlu0 0
  %767 = vperm.xlu0 %766, %v277
  %v768 = vpop.permute.xlu0 %767
  %771 = vset.pattern.permute.xlu0 0
  %772 = vperm.xlu0 %771, %v278
  %v773 = vpop.permute.xlu0 %772
  %776 = vset.pattern.permute.xlu0 0
  %777 = vperm.xlu0 %776, %v279
  %v778 = vpop.permute.xlu0 %777
  %781 = vset.pattern.permute.xlu0 0
  %782 = vperm.xlu0 %781, %v280
  %v783 = vpop.permute.xlu0 %782
  %786 = vset.pattern.permute.xlu0 0
  %787 = vperm.xlu0 %786, %v281
  %v788 = vpop.permute.xlu0 %787
  %791 = vset.pattern.permute.xlu0 0
  %792 = vperm.xlu0 %791, %v282
  %v793 = vpop.permute.xlu0 %792
  %796 = vset.pattern.permute.xlu0 0
  %797 = vperm.xlu0 %796, %v283
  %v798 = vpop.permute.xlu0 %797
  %801 = vset.pattern.permute.xlu0 0
  %802 = vperm.xlu0 %801, %v284
  %v803 = vpop.permute.xlu0 %802
  %806 = vset.pattern.permute.xlu0 0
  %807 = vperm.xlu0 %806, %v285
  %v808 = vpop.permute.xlu0 %807
  %811 = vset.pattern.permute.xlu0 0
  %812 = vperm.xlu0 %811, %v286
  %v813 = vpop.permute.xlu0 %812
  %816 = vset.pattern.permute.xlu0 0
  %817 = vperm.xlu0 %816, %v287
  %v818 = vpop.permute.xlu0 %817
  %821 = vset.pattern.permute.xlu0 0
  %822 = vperm.xlu0 %821, %v288
  %v823 = vpop.permute.xlu0 %822
  %826 = vset.pattern.permute.xlu0 0
  %827 = vperm.xlu0 %826, %v289
  %v828 = vpop.permute.xlu0 %827
  %831 = vset.pattern.permute.xlu0 0
  %832 = vperm.xlu0 %831, %v290
  %v833 = vpop.permute.xlu0 %832
  %836 = vset.pattern.permute.xlu0 0
  %837 = vperm.xlu0 %836, %v291
  %v838 = vpop.permute.xlu0 %837
  %841 = vset.pattern.permute.xlu0 0
  %842 = vperm.xlu0 %841, %v292
  %v843 = vpop.permute.xlu0 %842
  %846 = vset.pattern.permute.xlu0 0
  %847 = vperm.xlu0 %846, %v293
  %v848 = vpop.permute.xlu0 %847
  %851 = vset.pattern.permute.xlu0 0
  %852 = vperm.xlu0 %851, %v294
  %v853 = vpop.permute.xlu0 %852
  %856 = vset.pattern.permute.xlu0 0
  %857 = vperm.xlu0 %856, %v295
  %v858 = vpop.permute.xlu0 %857
  %861 = vset.pattern.permute.xlu0 0
  %862 = vperm.xlu0 %861, %v296
  %v863 = vpop.permute.xlu0 %862
  %866 = vset.pattern.permute.xlu0 0
  %867 = vperm.xlu0 %866, %v297
  %v868 = vpop.permute.xlu0 %867
  %871 = vset.pattern.permute.xlu0 0
  %872 = vperm.xlu0 %871, %v298
  %v873 = vpop.permute.xlu0 %872
  %876 = vset.pattern.permute.xlu0 0
  %877 = vperm.xlu0 %876, %v299
  %v878 = vpop.permute.xlu0 %877
  %881 = vset.pattern.permute.xlu0 0
  %882 = vperm.xlu0 %881, %v300
  %v883 = vpop.permute.xlu0 %882
  %886 = vset.pattern.permute.xlu0 0
  %887 = vperm.xlu0 %886, %v301
  %v888 = vpop.permute.xlu0 %887
  %891 = vset.pattern.permute.xlu0 0
  %892 = vperm.xlu0 %891, %v302
  %v893 = vpop.permute.xlu0 %892
  %896 = vset.pattern.permute.xlu0 0
  %897 = vperm.xlu0 %896, %v303
  %v898 = vpop.permute.xlu0 %897
  %901 = vset.pattern.permute.xlu0 0
  %902 = vperm.xlu0 %901, %v304
  %v903 = vpop.permute.xlu0 %902
  %906 = vset.pattern.permute.xlu0 0
  %907 = vperm.xlu0 %906, %v305
  %v908 = vpop.permute.xlu0 %907
  %911 = vset.pattern.permute.xlu0 0
  %912 = vperm.xlu0 %911, %v306
  %v913 = vpop.permute.xlu0 %912
  %916 = vset.pattern.permute.xlu0 0
  %917 = vperm.xlu0 %916, %v307
  %v918 = vpop.permute.xlu0 %917
  %921 = vset.pattern.permute.xlu0 0
  %922 = vperm.xlu0 %921, %v308
  %v923 = vpop.permute.xlu0 %922
  %926 = vset.pattern.permute.xlu0 0
  %927 = vperm.xlu0 %926, %v309
  %v928 = vpop.permute.xlu0 %927
  %931 = vset.pattern.permute.xlu0 0
  %932 = vperm.xlu0 %931, %v310
  %v933 = vpop.permute.xlu0 %932
  %936 = vset.pattern.permute.xlu0 0
  %937 = vperm.xlu0 %936, %v311
  %v938 = vpop.permute.xlu0 %937
  %941 = vset.pattern.permute.xlu0 0
  %942 = vperm.xlu0 %941, %v312
  %v943 = vpop.permute.xlu0 %942
  %946 = vset.pattern.permute.xlu0 0
  %947 = vperm.xlu0 %946, %v313
  %v948 = vpop.permute.xlu0 %947
  %951 = vset.pattern.permute.xlu0 0
  %952 = vperm.xlu0 %951, %v314
  %v953 = vpop.permute.xlu0 %952
  %956 = vset.pattern.permute.xlu0 0
  %957 = vperm.xlu0 %956, %v315
  %v958 = vpop.permute.xlu0 %957
  %961 = vset.pattern.permute.xlu0 0
  %962 = vperm.xlu0 %961, %v316
  %v963 = vpop.permute.xlu0 %962
  %966 = vset.pattern.permute.xlu0 0
  %967 = vperm.xlu0 %966, %v317
  %v968 = vpop.permute.xlu0 %967
  %971 = vset.pattern.permute.xlu0 0
  %972 = vperm.xlu0 %971, %v318
  %v973 = vpop.permute.xlu0 %972
  %976 = vset.pattern.permute.xlu0 0
  %977 = vperm.xlu0 %976, %v319
  %v978 = vpop.permute.xlu0 %977
  %981 = vset.pattern.permute.xlu0 0
  %982 = vperm.xlu0 %981, %v320
  %v983 = vpop.permute.xlu0 %982
  %986 = vset.pattern.permute.xlu0 0
  %987 = vperm.xlu0 %986, %v321
  %v988 = vpop.permute.xlu0 %987
  %991 = vset.pattern.permute.xlu0 0
  %992 = vperm.xlu0 %991, %v322
  %v993 = vpop.permute.xlu0 %992
  %996 = vset.pattern.permute.xlu0 0
  %997 = vperm.xlu0 %996, %v323
  %v998 = vpop.permute.xlu0 %997
  %1001 = vset.pattern.permute.xlu0 0
  %1002 = vperm.xlu0 %1001, %v324
  %v1003 = vpop.permute.xlu0 %1002
  %1006 = vset.pattern.permute.xlu0 0
  %1007 = vperm.xlu0 %1006, %v325
  %v1008 = vpop.permute.xlu0 %1007
  %1011 = vset.pattern.permute.xlu0 0
  %1012 = vperm.xlu0 %1011, %v326
  %v1013 = vpop.permute.xlu0 %1012
  %1016 = vset.pattern.permute.xlu0 0
  %1017 = vperm.xlu0 %1016, %v327
  %v1018 = vpop.permute.xlu0 %1017
  %1021 = vset.pattern.permute.xlu0 0
  %1022 = vperm.xlu0 %1021, %v328
  %v1023 = vpop.permute.xlu0 %1022
  %1026 = vset.pattern.permute.xlu0 0
  %1027 = vperm.xlu0 %1026, %v329
  %v1028 = vpop.permute.xlu0 %1027
  %1031 = vset.pattern.permute.xlu0 0
  %1032 = vperm.xlu0 %1031, %v330
  %v1033 = vpop.permute.xlu0 %1032
  %1036 = vset.pattern.permute.xlu0 0
  %1037 = vperm.xlu0 %1036, %v331
  %v1038 = vpop.permute.xlu0 %1037
  %1041 = vset.pattern.permute.xlu0 0
  %1042 = vperm.xlu0 %1041, %v332
  %v1043 = vpop.permute.xlu0 %1042
  %1046 = vset.pattern.permute.xlu0 0
  %1047 = vperm.xlu0 %1046, %v333
  %v1048 = vpop.permute.xlu0 %1047
  %1051 = vset.pattern.permute.xlu0 0
  %1052 = vperm.xlu0 %1051, %v334
  %v1053 = vpop.permute.xlu0 %1052
  %1056 = vset.pattern.permute.xlu0 0
  %1057 = vperm.xlu0 %1056, %v335
  %v1058 = vpop.permute.xlu0 %1057
  %1061 = vset.pattern.permute.xlu0 0
  %1062 = vperm.xlu0 %1061, %v336
  %v1063 = vpop.permute.xlu0 %1062
  %1066 = vset.pattern.permute.xlu0 0
  %1067 = vperm.xlu0 %1066, %v337
  %v1068 = vpop.permute.xlu0 %1067
  %1071 = vset.pattern.permute.xlu0 0
  %1072 = vperm.xlu0 %1071, %v338
  %v1073 = vpop.permute.xlu0 %1072
  %1076 = vset.pattern.permute.xlu0 0
  %1077 = vperm.xlu0 %1076, %v339
  %v1078 = vpop.permute.xlu0 %1077
  %1081 = vset.pattern.permute.xlu0 0
  %1082 = vperm.xlu0 %1081, %v340
  %v1083 = vpop.permute.xlu0 %1082
  %1086 = vset.pattern.permute.xlu0 0
  %1087 = vperm.xlu0 %1086, %v341
  %v1088 = vpop.permute.xlu0 %1087
  %1091 = vset.pattern.permute.xlu0 0
  %1092 = vperm.xlu0 %1091, %v342
  %v1093 = vpop.permute.xlu0 %1092
  %1096 = vset.pattern.permute.xlu0 0
  %1097 = vperm.xlu0 %1096, %v343
  %v1098 = vpop.permute.xlu0 %1097
  %1101 = vset.pattern.permute.xlu0 0
  %1102 = vperm.xlu0 %1101, %v344
  %v1103 = vpop.permute.xlu0 %1102
  %1106 = vset.pattern.permute.xlu0 0
  %1107 = vperm.xlu0 %1106, %v345
  %v1108 = vpop.permute.xlu0 %1107
  %1111 = vset.pattern.permute.xlu0 0
  %1112 = vperm.xlu0 %1111, %v346
  %v1113 = vpop.permute.xlu0 %1112
  %1116 = vset.pattern.permute.xlu0 0
  %1117 = vperm.xlu0 %1116, %v347
  %v1118 = vpop.permute.xlu0 %1117
  %1121 = vset.pattern.permute.xlu0 0
  %1122 = vperm.xlu0 %1121, %v348
  %v1123 = vpop.permute.xlu0 %1122
  %1126 = vset.pattern.permute.xlu0 0
  %1127 = vperm.xlu0 %1126, %v349
  %v1128 = vpop.permute.xlu0 %1127
  %1131 = vset.pattern.permute.xlu0 0
  %1132 = vperm.xlu0 %1131, %v350
  %v1133 = vpop.permute.xlu0 %1132
  %1136 = vset.pattern.permute.xlu0 0
  %1137 = vperm.xlu0 %1136, %v351
  %v1138 = vpop.permute.xlu0 %1137
  %1141 = vset.pattern.permute.xlu0 0
  %1142 = vperm.xlu0 %1141, %v352
  %v1143 = vpop.permute.xlu0 %1142
  %1146 = vset.pattern.permute.xlu0 0
  %1147 = vperm.xlu0 %1146, %v353
  %v1148 = vpop.permute.xlu0 %1147
  %1151 = vset.pattern.permute.xlu0 0
  %1152 = vperm.xlu0 %1151, %v354
  %v1153 = vpop.permute.xlu0 %1152
  %1156 = vset.pattern.permute.xlu0 0
  %1157 = vperm.xlu0 %1156, %v355
  %v1158 = vpop.permute.xlu0 %1157
  %1161 = vset.pattern.permute.xlu0 0
  %1162 = vperm.xlu0 %1161, %v356
  %v1163 = vpop.permute.xlu0 %1162
  %1166 = vset.pattern.permute.xlu0 0
  %1167 = vperm.xlu0 %1166, %v357
  %v1168 = vpop.permute.xlu0 %1167
  %1171 = vset.pattern.permute.xlu0 0
  %1172 = vperm.xlu0 %1171, %v358
  %v1173 = vpop.permute.xlu0 %1172
  %1176 = vset.pattern.permute.xlu0 0
  %1177 = vperm.xlu0 %1176, %v359
  %v1178 = vpop.permute.xlu0 %1177
  %1181 = vset.pattern.permute.xlu0 0
  %1182 = vperm.xlu0 %1181, %v360
  %v1183 = vpop.permute.xlu0 %1182
  %1186 = vset.pattern.permute.xlu0 0
  %1187 = vperm.xlu0 %1186, %v361
  %v1188 = vpop.permute.xlu0 %1187
  %1191 = vset.pattern.permute.xlu0 0
  %1192 = vperm.xlu0 %1191, %v362
  %v1193 = vpop.permute.xlu0 %1192
  %1196 = vset.pattern.permute.xlu0 0
  %1197 = vperm.xlu0 %1196, %v363
  %v1198 = vpop.permute.xlu0 %1197
  %1201 = vset.pattern.permute.xlu0 0
  %1202 = vperm.xlu0 %1201, %v364
  %v1203 = vpop.permute.xlu0 %1202
  %1206 = vset.pattern.permute.xlu0 0
  %1207 = vperm.xlu0 %1206, %v365
  %v1208 = vpop.permute.xlu0 %1207
  %1211 = vset.pattern.permute.xlu0 0
  %1212 = vperm.xlu0 %1211, %v366
  %v1213 = vpop.permute.xlu0 %1212
  %1216 = vset.pattern.permute.xlu0 0
  %1217 = vperm.xlu0 %1216, %v367
  %v1218 = vpop.permute.xlu0 %1217
  %1221 = vset.pattern.permute.xlu0 0
  %1222 = vperm.xlu0 %1221, %v368
  %v1223 = vpop.permute.xlu0 %1222
  %1226 = vset.pattern.permute.xlu0 0
  %1227 = vperm.xlu0 %1226, %v369
  %v1228 = vpop.permute.xlu0 %1227
  %1231 = vset.pattern.permute.xlu0 0
  %1232 = vperm.xlu0 %1231, %v370
  %v1233 = vpop.permute.xlu0 %1232
  %1236 = vset.pattern.permute.xlu0 0
  %1237 = vperm.xlu0 %1236, %v371
  %v1238 = vpop.permute.xlu0 %1237
  %1241 = vset.pattern.permute.xlu0 0
  %1242 = vperm.xlu0 %1241, %v372
  %v1243 = vpop.permute.xlu0 %1242
  %1246 = vset.pattern.permute.xlu0 0
  %1247 = vperm.xlu0 %1246, %v373
  %v1248 = vpop.permute.xlu0 %1247
  %1251 = vset.pattern.permute.xlu0 0
  %1252 = vperm.xlu0 %1251, %v374
  %v1253 = vpop.permute.xlu0 %1252
  %1256 = vset.pattern.permute.xlu0 0
  %1257 = vperm.xlu0 %1256, %v375
  %v1258 = vpop.permute.xlu0 %1257
  %1261 = vset.pattern.permute.xlu0 0
  %1262 = vperm.xlu0 %1261, %v376
  %v1263 = vpop.permute.xlu0 %1262
  %1266 = vset.pattern.permute.xlu0 0
  %1267 = vperm.xlu0 %1266, %v377
  %v1268 = vpop.permute.xlu0 %1267
  %1271 = vset.pattern.permute.xlu0 0
  %1272 = vperm.xlu0 %1271, %v378
  %v1273 = vpop.permute.xlu0 %1272
  %1276 = vset.pattern.permute.xlu0 0
  %1277 = vperm.xlu0 %1276, %v379
  %v1278 = vpop.permute.xlu0 %1277
  %1281 = vset.pattern.permute.xlu0 0
  %1282 = vperm.xlu0 %1281, %v380
  %v1283 = vpop.permute.xlu0 %1282
  %1286 = vset.pattern.permute.xlu0 0
  %1287 = vperm.xlu0 %1286, %v381
  %v1288 = vpop.permute.xlu0 %1287
  %1291 = vset.pattern.permute.xlu0 0
  %1292 = vperm.xlu0 %1291, %v382
  %v1293 = vpop.permute.xlu0 %1292
  %1296 = vset.pattern.permute.xlu0 0
  %1297 = vperm.xlu0 %1296, %v383
  %v1298 = vpop.permute.xlu0 %1297
  %1301 = vset.pattern.permute.xlu0 0
  %1302 = vperm.xlu0 %1301, %v384
  %v1303 = vpop.permute.xlu0 %1302
  %1306 = vset.pattern.permute.xlu0 0
  %1307 = vperm.xlu0 %1306, %v385
  %v1308 = vpop.permute.xlu0 %1307
  %1311 = vset.pattern.permute.xlu0 0
  %1312 = vperm.xlu0 %1311, %v386
  %v1313 = vpop.permute.xlu0 %1312
  %1316 = vset.pattern.permute.xlu0 0
  %1317 = vperm.xlu0 %1316, %v387
  %v1318 = vpop.permute.xlu0 %1317
  %1321 = vset.pattern.permute.xlu0 0
  %1322 = vperm.xlu0 %1321, %v388
  %v1323 = vpop.permute.xlu0 %1322
  %1326 = vset.pattern.permute.xlu0 0
  %1327 = vperm.xlu0 %1326, %v389
  %v1328 = vpop.permute.xlu0 %1327
  %1331 = vset.pattern.permute.xlu0 0
  %1332 = vperm.xlu0 %1331, %v390
  %v1333 = vpop.permute.xlu0 %1332
  %1336 = vset.pattern.permute.xlu0 0
  %1337 = vperm.xlu0 %1336, %v391
  %v1338 = vpop.permute.xlu0 %1337
  %1341 = vset.pattern.permute.xlu0 0
  %1342 = vperm.xlu0 %1341, %v392
  %v1343 = vpop.permute.xlu0 %1342
  %1346 = vset.pattern.permute.xlu0 0
  %1347 = vperm.xlu0 %1346, %v393
  %v1348 = vpop.permute.xlu0 %1347
  %1351 = vset.pattern.permute.xlu0 0
  %1352 = vperm.xlu0 %1351, %v394
  %v1353 = vpop.permute.xlu0 %1352
  %v1355 = vmul.f32 %v11, %v398
  %v1356 = vmul.f32 %v12, %v403
  %v1357 = vmul.f32 %v13, %v408
  %v1358 = vmul.f32 %v14, %v413
  %v1359 = vmul.f32 %v15, %v418
  %v1360 = vmul.f32 %v16, %v423
  %v1361 = vmul.f32 %v17, %v428
  %v1362 = vmul.f32 %v18, %v433
  %v1363 = vmul.f32 %v19, %v438
  %v1364 = vmul.f32 %v20, %v443
  %v1365 = vmul.f32 %v21, %v448
  %v1366 = vmul.f32 %v22, %v453
  %v1367 = vmul.f32 %v23, %v458
  %v1368 = vmul.f32 %v24, %v463
  %v1369 = vmul.f32 %v25, %v468
  %v1370 = vmul.f32 %v26, %v473
  %v1371 = vmul.f32 %v27, %v478
  %v1372 = vmul.f32 %v28, %v483
  %v1373 = vmul.f32 %v29, %v488
  %v1374 = vmul.f32 %v30, %v493
  %v1375 = vmul.f32 %v31, %v498
  %v1376 = vmul.f32 %v32, %v503
  %v1377 = vmul.f32 %v33, %v508
  %v1378 = vmul.f32 %v34, %v513
  %v1379 = vmul.f32 %v35, %v518
  %v1380 = vmul.f32 %v36, %v523
  %v1381 = vmul.f32 %v37, %v528
  %v1382 = vmul.f32 %v38, %v533
  %v1383 = vmul.f32 %v39, %v538
  %v1384 = vmul.f32 %v40, %v543
  %v1385 = vmul.f32 %v41, %v548
  %v1386 = vmul.f32 %v42, %v553
  %v1387 = vmul.f32 %v43, %v558
  %v1388 = vmul.f32 %v44, %v563
  %v1389 = vmul.f32 %v45, %v568
  %v1390 = vmul.f32 %v46, %v573
  %v1391 = vmul.f32 %v47, %v578
  %v1392 = vmul.f32 %v48, %v583
  %v1393 = vmul.f32 %v49, %v588
  %v1394 = vmul.f32 %v50, %v593
  %v1395 = vmul.f32 %v51, %v598
  %v1396 = vmul.f32 %v52, %v603
  %v1397 = vmul.f32 %v53, %v608
  %v1398 = vmul.f32 %v54, %v613
  %v1399 = vmul.f32 %v55, %v618
  %v1400 = vmul.f32 %v56, %v623
  %v1401 = vmul.f32 %v57, %v628
  %v1402 = vmul.f32 %v58, %v633
  %v1403 = vmul.f32 %v59, %v638
  %v1404 = vmul.f32 %v60, %v643
  %v1405 = vmul.f32 %v61, %v648
  %v1406 = vmul.f32 %v62, %v653
  %v1407 = vmul.f32 %v63, %v658
  %v1408 = vmul.f32 %v64, %v663
  %v1409 = vmul.f32 %v65, %v668
  %v1410 = vmul.f32 %v66, %v673
  %v1411 = vmul.f32 %v67, %v678
  %v1412 = vmul.f32 %v68, %v683
  %v1413 = vmul.f32 %v69, %v688
  %v1414 = vmul.f32 %v70, %v693
  %v1415 = vmul.f32 %v71, %v698
  %v1416 = vmul.f32 %v72, %v703
  %v1417 = vmul.f32 %v73, %v708
  %v1418 = vmul.f32 %v74, %v713
  %v1419 = vmul.f32 %v75, %v718
  %v1420 = vmul.f32 %v76, %v723
  %v1421 = vmul.f32 %v77, %v728
  %v1422 = vmul.f32 %v78, %v733
  %v1423 = vmul.f32 %v79, %v738
  %v1424 = vmul.f32 %v80, %v743
  %v1425 = vmul.f32 %v81, %v748
  %v1426 = vmul.f32 %v82, %v753
  %v1427 = vmul.f32 %v83, %v758
  %v1428 = vmul.f32 %v84, %v763
  %v1429 = vmul.f32 %v85, %v768
  %v1430 = vmul.f32 %v86, %v773
  %v1431 = vmul.f32 %v87, %v778
  %v1432 = vmul.f32 %v88, %v783
  %v1433 = vmul.f32 %v89, %v788
  %v1434 = vmul.f32 %v90, %v793
  %v1435 = vmul.f32 %v91, %v798
  %v1436 = vmul.f32 %v92, %v803
  %v1437 = vmul.f32 %v93, %v808
  %v1438 = vmul.f32 %v94, %v813
  %v1439 = vmul.f32 %v95, %v818
  %v1440 = vmul.f32 %v96, %v823
  %v1441 = vmul.f32 %v97, %v828
  %v1442 = vmul.f32 %v98, %v833
  %v1443 = vmul.f32 %v99, %v838
  %v1444 = vmul.f32 %v100, %v843
  %v1445 = vmul.f32 %v101, %v848
  %v1446 = vmul.f32 %v102, %v853
  %v1447 = vmul.f32 %v103, %v858
  %v1448 = vmul.f32 %v104, %v863
  %v1449 = vmul.f32 %v105, %v868
  %v1450 = vmul.f32 %v106, %v873
  %v1451 = vmul.f32 %v107, %v878
  %v1452 = vmul.f32 %v108, %v883
  %v1453 = vmul.f32 %v109, %v888
  %v1454 = vmul.f32 %v110, %v893
  %v1455 = vmul.f32 %v111, %v898
  %v1456 = vmul.f32 %v112, %v903
  %v1457 = vmul.f32 %v113, %v908
  %v1458 = vmul.f32 %v114, %v913
  %v1459 = vmul.f32 %v115, %v918
  %v1460 = vmul.f32 %v116, %v923
  %v1461 = vmul.f32 %v117, %v928
  %v1462 = vmul.f32 %v118, %v933
  %v1463 = vmul.f32 %v119, %v938
  %v1464 = vmul.f32 %v120, %v943
  %v1465 = vmul.f32 %v121, %v948
  %v1466 = vmul.f32 %v122, %v953
  %v1467 = vmul.f32 %v123, %v958
  %v1468 = vmul.f32 %v124, %v963
  %v1469 = vmul.f32 %v125, %v968
  %v1470 = vmul.f32 %v126, %v973
  %v1471 = vmul.f32 %v127, %v978
  %v1472 = vmul.f32 %v128, %v983
  %v1473 = vmul.f32 %v129, %v988
  %v1474 = vmul.f32 %v130, %v993
  %v1475 = vmul.f32 %v131, %v998
  %v1476 = vmul.f32 %v132, %v1003
  %v1477 = vmul.f32 %v133, %v1008
  %v1478 = vmul.f32 %v134, %v1013
  %v1479 = vmul.f32 %v135, %v1018
  %v1480 = vmul.f32 %v136, %v1023
  %v1481 = vmul.f32 %v137, %v1028
  %v1482 = vmul.f32 %v138, %v1033
  %v1483 = vmul.f32 %v139, %v1038
  %v1484 = vmul.f32 %v140, %v1043
  %v1485 = vmul.f32 %v141, %v1048
  %v1486 = vmul.f32 %v142, %v1053
  %v1487 = vmul.f32 %v143, %v1058
  %v1488 = vmul.f32 %v144, %v1063
  %v1489 = vmul.f32 %v145, %v1068
  %v1490 = vmul.f32 %v146, %v1073
  %v1491 = vmul.f32 %v147, %v1078
  %v1492 = vmul.f32 %v148, %v1083
  %v1493 = vmul.f32 %v149, %v1088
  %v1494 = vmul.f32 %v150, %v1093
  %v1495 = vmul.f32 %v151, %v1098
  %v1496 = vmul.f32 %v152, %v1103
  %v1497 = vmul.f32 %v153, %v1108
  %v1498 = vmul.f32 %v154, %v1113
  %v1499 = vmul.f32 %v155, %v1118
  %v1500 = vmul.f32 %v156, %v1123
  %v1501 = vmul.f32 %v157, %v1128
  %v1502 = vmul.f32 %v158, %v1133
  %v1503 = vmul.f32 %v159, %v1138
  %v1504 = vmul.f32 %v160, %v1143
  %v1505 = vmul.f32 %v161, %v1148
  %v1506 = vmul.f32 %v162, %v1153
  %v1507 = vmul.f32 %v163, %v1158
  %v1508 = vmul.f32 %v164, %v1163
  %v1509 = vmul.f32 %v165, %v1168
  %v1510 = vmul.f32 %v166, %v1173
  %v1511 = vmul.f32 %v167, %v1178
  %v1512 = vmul.f32 %v168, %v1183
  %v1513 = vmul.f32 %v169, %v1188
  %v1514 = vmul.f32 %v170, %v1193
  %v1515 = vmul.f32 %v171, %v1198
  %v1516 = vmul.f32 %v172, %v1203
  %v1517 = vmul.f32 %v173, %v1208
  %v1518 = vmul.f32 %v174, %v1213
  %v1519 = vmul.f32 %v175, %v1218
  %v1520 = vmul.f32 %v176, %v1223
  %v1521 = vmul.f32 %v177, %v1228
  %v1522 = vmul.f32 %v178, %v1233
  %v1523 = vmul.f32 %v179, %v1238
  %v1524 = vmul.f32 %v180, %v1243
  %v1525 = vmul.f32 %v181, %v1248
  %v1526 = vmul.f32 %v182, %v1253
  %v1527 = vmul.f32 %v183, %v1258
  %v1528 = vmul.f32 %v184, %v1263
  %v1529 = vmul.f32 %v185, %v1268
  %v1530 = vmul.f32 %v186, %v1273
  %v1531 = vmul.f32 %v187, %v1278
  %v1532 = vmul.f32 %v188, %v1283
  %v1533 = vmul.f32 %v189, %v1288
  %v1534 = vmul.f32 %v190, %v1293
  %v1535 = vmul.f32 %v191, %v1298
  %v1536 = vmul.f32 %v192, %v1303
  %v1537 = vmul.f32 %v193, %v1308
  %v1538 = vmul.f32 %v194, %v1313
  %v1539 = vmul.f32 %v195, %v1318
  %v1540 = vmul.f32 %v196, %v1323
  %v1541 = vmul.f32 %v197, %v1328
  %v1542 = vmul.f32 %v198, %v1333
  %v1543 = vmul.f32 %v199, %v1338
  %v1544 = vmul.f32 %v200, %v1343
  %v1545 = vmul.f32 %v201, %v1348
  %v1546 = vmul.f32 %v202, %v1353
  %vm1547 = vcmask 400384
  %1548 = vst.msk [vmem:[%s2] sm:$0xff] %vm1547, %v1355
  %1549 = vst.msk [vmem:[%s2 + $0x8] sm:$0xff] %vm1547, %v1356
  %1550 = vst.msk [vmem:[%s2 + $0x10] sm:$0xff] %vm1547, %v1357
  %1551 = vst.msk [vmem:[%s2 + $0x18] sm:$0xff] %vm1547, %v1358
  %1552 = vst.msk [vmem:[%s2 + $0x20] sm:$0xff] %vm1547, %v1359
  %1553 = vst.msk [vmem:[%s2 + $0x28] sm:$0xff] %vm1547, %v1360
  %1554 = vst.msk [vmem:[%s2 + $0x30] sm:$0xff] %vm1547, %v1361
  %1555 = vst.msk [vmem:[%s2 + $0x38] sm:$0xff] %vm1547, %v1362
  %1556 = vst.msk [vmem:[%s2 + $0x40] sm:$0xff] %vm1547, %v1363
  %1557 = vst.msk [vmem:[%s2 + $0x48] sm:$0xff] %vm1547, %v1364
  %1558 = vst.msk [vmem:[%s2 + $0x50] sm:$0xff] %vm1547, %v1365
  %1559 = vst.msk [vmem:[%s2 + $0x58] sm:$0xff] %vm1547, %v1366
  %1560 = vst.msk [vmem:[%s2 + $0x60] sm:$0xff] %vm1547, %v1367
  %1561 = vst.msk [vmem:[%s2 + $0x68] sm:$0xff] %vm1547, %v1368
  %1562 = vst.msk [vmem:[%s2 + $0x70] sm:$0xff] %vm1547, %v1369
  %1563 = vst.msk [vmem:[%s2 + $0x78] sm:$0xff] %vm1547, %v1370
  %1564 = vst.msk [vmem:[%s2 + $0x80] sm:$0xff] %vm1547, %v1371
  %1565 = vst.msk [vmem:[%s2 + $0x88] sm:$0xff] %vm1547, %v1372
  %1566 = vst.msk [vmem:[%s2 + $0x90] sm:$0xff] %vm1547, %v1373
  %1567 = vst.msk [vmem:[%s2 + $0x98] sm:$0xff] %vm1547, %v1374
  %1568 = vst.msk [vmem:[%s2 + $0xa0] sm:$0xff] %vm1547, %v1375
  %1569 = vst.msk [vmem:[%s2 + $0xa8] sm:$0xff] %vm1547, %v1376
  %1570 = vst.msk [vmem:[%s2 + $0xb0] sm:$0xff] %vm1547, %v1377
  %1571 = vst.msk [vmem:[%s2 + $0xb8] sm:$0xff] %vm1547, %v1378
  %1572 = vst.msk [vmem:[%s2 + $0xc0] sm:$0xff] %vm1547, %v1379
  %1573 = vst.msk [vmem:[%s2 + $0xc8] sm:$0xff] %vm1547, %v1380
  %1574 = vst.msk [vmem:[%s2 + $0xd0] sm:$0xff] %vm1547, %v1381
  %1575 = vst.msk [vmem:[%s2 + $0xd8] sm:$0xff] %vm1547, %v1382
  %1576 = vst.msk [vmem:[%s2 + $0xe0] sm:$0xff] %vm1547, %v1383
  %1577 = vst.msk [vmem:[%s2 + $0xe8] sm:$0xff] %vm1547, %v1384
  %1578 = vst.msk [vmem:[%s2 + $0xf0] sm:$0xff] %vm1547, %v1385
  %1579 = vst.msk [vmem:[%s2 + $0xf8] sm:$0xff] %vm1547, %v1386
  %1580 = vst.msk [vmem:[%s2 + $0x100] sm:$0xff] %vm1547, %v1387
  %1581 = vst.msk [vmem:[%s2 + $0x108] sm:$0xff] %vm1547, %v1388
  %1582 = vst.msk [vmem:[%s2 + $0x110] sm:$0xff] %vm1547, %v1389
  %1583 = vst.msk [vmem:[%s2 + $0x118] sm:$0xff] %vm1547, %v1390
  %1584 = vst.msk [vmem:[%s2 + $0x120] sm:$0xff] %vm1547, %v1391
  %1585 = vst.msk [vmem:[%s2 + $0x128] sm:$0xff] %vm1547, %v1392
  %1586 = vst.msk [vmem:[%s2 + $0x130] sm:$0xff] %vm1547, %v1393
  %1587 = vst.msk [vmem:[%s2 + $0x138] sm:$0xff] %vm1547, %v1394
  %1588 = vst.msk [vmem:[%s2 + $0x140] sm:$0xff] %vm1547, %v1395
  %1589 = vst.msk [vmem:[%s2 + $0x148] sm:$0xff] %vm1547, %v1396
  %1590 = vst.msk [vmem:[%s2 + $0x150] sm:$0xff] %vm1547, %v1397
  %1591 = vst.msk [vmem:[%s2 + $0x158] sm:$0xff] %vm1547, %v1398
  %1592 = vst.msk [vmem:[%s2 + $0x160] sm:$0xff] %vm1547, %v1399
  %1593 = vst.msk [vmem:[%s2 + $0x168] sm:$0xff] %vm1547, %v1400
  %1594 = vst.msk [vmem:[%s2 + $0x170] sm:$0xff] %vm1547, %v1401
  %1595 = vst.msk [vmem:[%s2 + $0x178] sm:$0xff] %vm1547, %v1402
  %1596 = vst.msk [vmem:[%s2 + $0x180] sm:$0xff] %vm1547, %v1403
  %1597 = vst.msk [vmem:[%s2 + $0x188] sm:$0xff] %vm1547, %v1404
  %1598 = vst.msk [vmem:[%s2 + $0x190] sm:$0xff] %vm1547, %v1405
  %1599 = vst.msk [vmem:[%s2 + $0x198] sm:$0xff] %vm1547, %v1406
  %1600 = vst.msk [vmem:[%s2 + $0x1a0] sm:$0xff] %vm1547, %v1407
  %1601 = vst.msk [vmem:[%s2 + $0x1a8] sm:$0xff] %vm1547, %v1408
  %1602 = vst.msk [vmem:[%s2 + $0x1b0] sm:$0xff] %vm1547, %v1409
  %1603 = vst.msk [vmem:[%s2 + $0x1b8] sm:$0xff] %vm1547, %v1410
  %1604 = vst.msk [vmem:[%s2 + $0x1c0] sm:$0xff] %vm1547, %v1411
  %1605 = vst.msk [vmem:[%s2 + $0x1c8] sm:$0xff] %vm1547, %v1412
  %1606 = vst.msk [vmem:[%s2 + $0x1d0] sm:$0xff] %vm1547, %v1413
  %1607 = vst.msk [vmem:[%s2 + $0x1d8] sm:$0xff] %vm1547, %v1414
  %1608 = vst.msk [vmem:[%s2 + $0x1e0] sm:$0xff] %vm1547, %v1415
  %1609 = vst.msk [vmem:[%s2 + $0x1e8] sm:$0xff] %vm1547, %v1416
  %1610 = vst.msk [vmem:[%s2 + $0x1f0] sm:$0xff] %vm1547, %v1417
  %1611 = vst.msk [vmem:[%s2 + $0x1f8] sm:$0xff] %vm1547, %v1418
  %1612 = vst.msk [vmem:[%s2 + $0x200] sm:$0xff] %vm1547, %v1419
  %1613 = vst.msk [vmem:[%s2 + $0x208] sm:$0xff] %vm1547, %v1420
  %1614 = vst.msk [vmem:[%s2 + $0x210] sm:$0xff] %vm1547, %v1421
  %1615 = vst.msk [vmem:[%s2 + $0x218] sm:$0xff] %vm1547, %v1422
  %1616 = vst.msk [vmem:[%s2 + $0x220] sm:$0xff] %vm1547, %v1423
  %1617 = vst.msk [vmem:[%s2 + $0x228] sm:$0xff] %vm1547, %v1424
  %1618 = vst.msk [vmem:[%s2 + $0x230] sm:$0xff] %vm1547, %v1425
  %1619 = vst.msk [vmem:[%s2 + $0x238] sm:$0xff] %vm1547, %v1426
  %1620 = vst.msk [vmem:[%s2 + $0x240] sm:$0xff] %vm1547, %v1427
  %1621 = vst.msk [vmem:[%s2 + $0x248] sm:$0xff] %vm1547, %v1428
  %1622 = vst.msk [vmem:[%s2 + $0x250] sm:$0xff] %vm1547, %v1429
  %1623 = vst.msk [vmem:[%s2 + $0x258] sm:$0xff] %vm1547, %v1430
  %1624 = vst.msk [vmem:[%s2 + $0x260] sm:$0xff] %vm1547, %v1431
  %1625 = vst.msk [vmem:[%s2 + $0x268] sm:$0xff] %vm1547, %v1432
  %1626 = vst.msk [vmem:[%s2 + $0x270] sm:$0xff] %vm1547, %v1433
  %1627 = vst.msk [vmem:[%s2 + $0x278] sm:$0xff] %vm1547, %v1434
  %1628 = vst.msk [vmem:[%s2 + $0x280] sm:$0xff] %vm1547, %v1435
  %1629 = vst.msk [vmem:[%s2 + $0x288] sm:$0xff] %vm1547, %v1436
  %1630 = vst.msk [vmem:[%s2 + $0x290] sm:$0xff] %vm1547, %v1437
  %1631 = vst.msk [vmem:[%s2 + $0x298] sm:$0xff] %vm1547, %v1438
  %1632 = vst.msk [vmem:[%s2 + $0x2a0] sm:$0xff] %vm1547, %v1439
  %1633 = vst.msk [vmem:[%s2 + $0x2a8] sm:$0xff] %vm1547, %v1440
  %1634 = vst.msk [vmem:[%s2 + $0x2b0] sm:$0xff] %vm1547, %v1441
  %1635 = vst.msk [vmem:[%s2 + $0x2b8] sm:$0xff] %vm1547, %v1442
  %1636 = vst.msk [vmem:[%s2 + $0x2c0] sm:$0xff] %vm1547, %v1443
  %1637 = vst.msk [vmem:[%s2 + $0x2c8] sm:$0xff] %vm1547, %v1444
  %1638 = vst.msk [vmem:[%s2 + $0x2d0] sm:$0xff] %vm1547, %v1445
  %1639 = vst.msk [vmem:[%s2 + $0x2d8] sm:$0xff] %vm1547, %v1446
  %1640 = vst.msk [vmem:[%s2 + $0x2e0] sm:$0xff] %vm1547, %v1447
  %1641 = vst.msk [vmem:[%s2 + $0x2e8] sm:$0xff] %vm1547, %v1448
  %1642 = vst.msk [vmem:[%s2 + $0x2f0] sm:$0xff] %vm1547, %v1449
  %1643 = vst.msk [vmem:[%s2 + $0x2f8] sm:$0xff] %vm1547, %v1450
  %1644 = vst.msk [vmem:[%s2 + $0x300] sm:$0xff] %vm1547, %v1451
  %1645 = vst.msk [vmem:[%s2 + $0x308] sm:$0xff] %vm1547, %v1452
  %1646 = vst.msk [vmem:[%s2 + $0x310] sm:$0xff] %vm1547, %v1453
  %1647 = vst.msk [vmem:[%s2 + $0x318] sm:$0xff] %vm1547, %v1454
  %1648 = vst.msk [vmem:[%s2 + $0x320] sm:$0xff] %vm1547, %v1455
  %1649 = vst.msk [vmem:[%s2 + $0x328] sm:$0xff] %vm1547, %v1456
  %1650 = vst.msk [vmem:[%s2 + $0x330] sm:$0xff] %vm1547, %v1457
  %1651 = vst.msk [vmem:[%s2 + $0x338] sm:$0xff] %vm1547, %v1458
  %1652 = vst.msk [vmem:[%s2 + $0x340] sm:$0xff] %vm1547, %v1459
  %1653 = vst.msk [vmem:[%s2 + $0x348] sm:$0xff] %vm1547, %v1460
  %1654 = vst.msk [vmem:[%s2 + $0x350] sm:$0xff] %vm1547, %v1461
  %1655 = vst.msk [vmem:[%s2 + $0x358] sm:$0xff] %vm1547, %v1462
  %1656 = vst.msk [vmem:[%s2 + $0x360] sm:$0xff] %vm1547, %v1463
  %1657 = vst.msk [vmem:[%s2 + $0x368] sm:$0xff] %vm1547, %v1464
  %1658 = vst.msk [vmem:[%s2 + $0x370] sm:$0xff] %vm1547, %v1465
  %1659 = vst.msk [vmem:[%s2 + $0x378] sm:$0xff] %vm1547, %v1466
  %1660 = vst.msk [vmem:[%s2 + $0x380] sm:$0xff] %vm1547, %v1467
  %1661 = vst.msk [vmem:[%s2 + $0x388] sm:$0xff] %vm1547, %v1468
  %1662 = vst.msk [vmem:[%s2 + $0x390] sm:$0xff] %vm1547, %v1469
  %1663 = vst.msk [vmem:[%s2 + $0x398] sm:$0xff] %vm1547, %v1470
  %1664 = vst.msk [vmem:[%s2 + $0x3a0] sm:$0xff] %vm1547, %v1471
  %1665 = vst.msk [vmem:[%s2 + $0x3a8] sm:$0xff] %vm1547, %v1472
  %1666 = vst.msk [vmem:[%s2 + $0x3b0] sm:$0xff] %vm1547, %v1473
  %1667 = vst.msk [vmem:[%s2 + $0x3b8] sm:$0xff] %vm1547, %v1474
  %1668 = vst.msk [vmem:[%s2 + $0x3c0] sm:$0xff] %vm1547, %v1475
  %1669 = vst.msk [vmem:[%s2 + $0x3c8] sm:$0xff] %vm1547, %v1476
  %1670 = vst.msk [vmem:[%s2 + $0x3d0] sm:$0xff] %vm1547, %v1477
  %1671 = vst.msk [vmem:[%s2 + $0x3d8] sm:$0xff] %vm1547, %v1478
  %1672 = vst.msk [vmem:[%s2 + $0x3e0] sm:$0xff] %vm1547, %v1479
  %1673 = vst.msk [vmem:[%s2 + $0x3e8] sm:$0xff] %vm1547, %v1480
  %1674 = vst.msk [vmem:[%s2 + $0x3f0] sm:$0xff] %vm1547, %v1481
  %1675 = vst.msk [vmem:[%s2 + $0x3f8] sm:$0xff] %vm1547, %v1482
  %1676 = vst.msk [vmem:[%s2 + $0x400] sm:$0xff] %vm1547, %v1483
  %1677 = vst.msk [vmem:[%s2 + $0x408] sm:$0xff] %vm1547, %v1484
  %1678 = vst.msk [vmem:[%s2 + $0x410] sm:$0xff] %vm1547, %v1485
  %1679 = vst.msk [vmem:[%s2 + $0x418] sm:$0xff] %vm1547, %v1486
  %1680 = vst.msk [vmem:[%s2 + $0x420] sm:$0xff] %vm1547, %v1487
  %1681 = vst.msk [vmem:[%s2 + $0x428] sm:$0xff] %vm1547, %v1488
  %1682 = vst.msk [vmem:[%s2 + $0x430] sm:$0xff] %vm1547, %v1489
  %1683 = vst.msk [vmem:[%s2 + $0x438] sm:$0xff] %vm1547, %v1490
  %1684 = vst.msk [vmem:[%s2 + $0x440] sm:$0xff] %vm1547, %v1491
  %1685 = vst.msk [vmem:[%s2 + $0x448] sm:$0xff] %vm1547, %v1492
  %1686 = vst.msk [vmem:[%s2 + $0x450] sm:$0xff] %vm1547, %v1493
  %1687 = vst.msk [vmem:[%s2 + $0x458] sm:$0xff] %vm1547, %v1494
  %1688 = vst.msk [vmem:[%s2 + $0x460] sm:$0xff] %vm1547, %v1495
  %1689 = vst.msk [vmem:[%s2 + $0x468] sm:$0xff] %vm1547, %v1496
  %1690 = vst.msk [vmem:[%s2 + $0x470] sm:$0xff] %vm1547, %v1497
  %1691 = vst.msk [vmem:[%s2 + $0x478] sm:$0xff] %vm1547, %v1498
  %1692 = vst.msk [vmem:[%s2 + $0x480] sm:$0xff] %vm1547, %v1499
  %1693 = vst.msk [vmem:[%s2 + $0x488] sm:$0xff] %vm1547, %v1500
  %1694 = vst.msk [vmem:[%s2 + $0x490] sm:$0xff] %vm1547, %v1501
  %1695 = vst.msk [vmem:[%s2 + $0x498] sm:$0xff] %vm1547, %v1502
  %1696 = vst.msk [vmem:[%s2 + $0x4a0] sm:$0xff] %vm1547, %v1503
  %1697 = vst.msk [vmem:[%s2 + $0x4a8] sm:$0xff] %vm1547, %v1504
  %1698 = vst.msk [vmem:[%s2 + $0x4b0] sm:$0xff] %vm1547, %v1505
  %1699 = vst.msk [vmem:[%s2 + $0x4b8] sm:$0xff] %vm1547, %v1506
  %1700 = vst.msk [vmem:[%s2 + $0x4c0] sm:$0xff] %vm1547, %v1507
  %1701 = vst.msk [vmem:[%s2 + $0x4c8] sm:$0xff] %vm1547, %v1508
  %1702 = vst.msk [vmem:[%s2 + $0x4d0] sm:$0xff] %vm1547, %v1509
  %1703 = vst.msk [vmem:[%s2 + $0x4d8] sm:$0xff] %vm1547, %v1510
  %1704 = vst.msk [vmem:[%s2 + $0x4e0] sm:$0xff] %vm1547, %v1511
  %1705 = vst.msk [vmem:[%s2 + $0x4e8] sm:$0xff] %vm1547, %v1512
  %1706 = vst.msk [vmem:[%s2 + $0x4f0] sm:$0xff] %vm1547, %v1513
  %1707 = vst.msk [vmem:[%s2 + $0x4f8] sm:$0xff] %vm1547, %v1514
  %1708 = vst.msk [vmem:[%s2 + $0x500] sm:$0xff] %vm1547, %v1515
  %1709 = vst.msk [vmem:[%s2 + $0x508] sm:$0xff] %vm1547, %v1516
  %1710 = vst.msk [vmem:[%s2 + $0x510] sm:$0xff] %vm1547, %v1517
  %1711 = vst.msk [vmem:[%s2 + $0x518] sm:$0xff] %vm1547, %v1518
  %1712 = vst.msk [vmem:[%s2 + $0x520] sm:$0xff] %vm1547, %v1519
  %1713 = vst.msk [vmem:[%s2 + $0x528] sm:$0xff] %vm1547, %v1520
  %1714 = vst.msk [vmem:[%s2 + $0x530] sm:$0xff] %vm1547, %v1521
  %1715 = vst.msk [vmem:[%s2 + $0x538] sm:$0xff] %vm1547, %v1522
  %1716 = vst.msk [vmem:[%s2 + $0x540] sm:$0xff] %vm1547, %v1523
  %1717 = vst.msk [vmem:[%s2 + $0x548] sm:$0xff] %vm1547, %v1524
  %1718 = vst.msk [vmem:[%s2 + $0x550] sm:$0xff] %vm1547, %v1525
  %1719 = vst.msk [vmem:[%s2 + $0x558] sm:$0xff] %vm1547, %v1526
  %1720 = vst.msk [vmem:[%s2 + $0x560] sm:$0xff] %vm1547, %v1527
  %1721 = vst.msk [vmem:[%s2 + $0x568] sm:$0xff] %vm1547, %v1528
  %1722 = vst.msk [vmem:[%s2 + $0x570] sm:$0xff] %vm1547, %v1529
  %1723 = vst.msk [vmem:[%s2 + $0x578] sm:$0xff] %vm1547, %v1530
  %1724 = vst.msk [vmem:[%s2 + $0x580] sm:$0xff] %vm1547, %v1531
  %1725 = vst.msk [vmem:[%s2 + $0x588] sm:$0xff] %vm1547, %v1532
  %1726 = vst.msk [vmem:[%s2 + $0x590] sm:$0xff] %vm1547, %v1533
  %1727 = vst.msk [vmem:[%s2 + $0x598] sm:$0xff] %vm1547, %v1534
  %1728 = vst.msk [vmem:[%s2 + $0x5a0] sm:$0xff] %vm1547, %v1535
  %1729 = vst.msk [vmem:[%s2 + $0x5a8] sm:$0xff] %vm1547, %v1536
  %1730 = vst.msk [vmem:[%s2 + $0x5b0] sm:$0xff] %vm1547, %v1537
  %1731 = vst.msk [vmem:[%s2 + $0x5b8] sm:$0xff] %vm1547, %v1538
  %1732 = vst.msk [vmem:[%s2 + $0x5c0] sm:$0xff] %vm1547, %v1539
  %1733 = vst.msk [vmem:[%s2 + $0x5c8] sm:$0xff] %vm1547, %v1540
  %1734 = vst.msk [vmem:[%s2 + $0x5d0] sm:$0xff] %vm1547, %v1541
  %1735 = vst.msk [vmem:[%s2 + $0x5d8] sm:$0xff] %vm1547, %v1542
  %1736 = vst.msk [vmem:[%s2 + $0x5e0] sm:$0xff] %vm1547, %v1543
  %1737 = vst.msk [vmem:[%s2 + $0x5e8] sm:$0xff] %vm1547, %v1544
  %1738 = vst.msk [vmem:[%s2 + $0x5f0] sm:$0xff] %vm1547, %v1545
  %1739 = vst.msk [vmem:[%s2 + $0x5f8] sm:$0xff] %vm1547, %v1546
  // Predicated region
  $region10: #{tpu_custom_call.1} parent=0 // pred_check
    _
  $region11: #{tpu_custom_call.1} parent=0 // pred_check_branch
    %1741 = sbr.rel (0) target = $region13
  $region12: #{tpu_custom_call.1} parent=0 // pred_region
    _
  $region13: #{tpu_custom_call.1} parent=0 // pred_fallthru
    _
  // Predicated region
  $region14: #{tpu_custom_call.1} parent=0 // pred_check
    _
  $region15: #{tpu_custom_call.1} parent=0 // pred_check_branch
    %1743 = sbr.rel (0) target = $region17
  $region16: #{tpu_custom_call.1} parent=0 // pred_region
    _
  $region17: #{tpu_custom_call.1} parent=0 // pred_fallthru
    _

</llo_original>
